<compile_context>
chip_gen: v5e
topology: v5e:2x2
jax: 0.10.0
libtpu: 0.0.40
codegen_flags: <defaults>
</compile_context>

<pallas_src>
import jax
import jax.numpy as jnp
from jax.experimental import pallas as pl
from jax.experimental.pallas import tpu as pltpu

# -------------------- configuration (small synthetic shapes) --------------------
B = 2                 # batch
C = 3                 # image channels
H = W_IMG = 16        # image spatial
PATCH = 8             # patch size
P = (H // PATCH) * (W_IMG // PATCH)   # 4 patch tokens per image
CP = C * PATCH * PATCH                # 192 flattened patch dim
D = 32                # embed_dim
HID = 64              # MLP hidden dim
NUM_TASKS = 5
NUM_EMBEDS = 3
VOCAB = 50
S = 8                 # text sequence length

# unified layout shared by both modalities inside the single kernel
T_ITEM = max(P, S)        # tokens per batch item (vision zero-padded up to this)
T = B * T_ITEM            # token rows per modality
F_IN = max(CP, VOCAB)     # shared contraction width of the embed matmul


# --------------------------------- Pallas kernel ---------------------------------
def encoder_kernel(xin_ref, wemb_ref, pos_ref, w1_ref, w2_ref, out_ref, x_scr):
    # token embedding: patch-embed matmul (vision) / one-hot embed matmul (text),
    # plus pre-tiled position embedding (patch bias already folded in).
    x = jnp.dot(xin_ref[...], wemb_ref[...],
                preferred_element_type=jnp.float32) + pos_ref[...]
    # synthetic encoder block: token-wise residual MLP with tanh-GELU
    # (== SigLIP's "gelu_pytorch_tanh"; do NOT switch to the exact erf form).
    h = jax.nn.gelu(jnp.dot(x, w1_ref[...], preferred_element_type=jnp.float32),
                    approximate=True)
    x = x + jnp.dot(h, w2_ref[...], preferred_element_type=jnp.float32)
    # method='third' pooling: token 0 of each batch item. Items are contiguous
    # T_ITEM-row groups, so stage in VMEM and read a strided sublane slice
    # (no iota/compare/selection-matmul).
    x_scr[...] = x
    pooled = x_scr[pl.ds(0, B, stride=T_ITEM), :]               # (B, D)
    # F.normalize(p=2, dim=-1, eps=1e-12)
    ss = jnp.sum(pooled * pooled, axis=-1, keepdims=True)
    inv = jax.lax.rsqrt(jnp.maximum(ss, 1e-24))                  # 1 / max(||x||, 1e-12)
    out_ref[...] = pooled * inv


def _modality_spec(tail_shape):
    # leading size-2 modality dim is squeezed; trailing dims are full blocks.
    return pl.BlockSpec((None,) + tuple(tail_shape),
                        lambda m: (m,) + (0,) * len(tail_shape))


_fused_encoders = pl.pallas_call(
    encoder_kernel,
    out_shape=jax.ShapeDtypeStruct((2, B, D), jnp.float32),
    grid_spec=pltpu.PrefetchScalarGridSpec(
        num_scalar_prefetch=0,
        grid=(2,),                                   # modality axis: 0=vision, 1=text
        in_specs=[
            _modality_spec((T, F_IN)),               # x_in  (patches / one-hot)
            _modality_spec((F_IN, D)),               # embed weight
            _modality_spec((T, D)),                  # pre-tiled position embedding
            _modality_spec((D, HID)),                # MLP W1
            _modality_spec((HID, D)),                # MLP W2
        ],
        out_specs=_modality_spec((B, D)),
        scratch_shapes=[pltpu.VMEM((T, D), jnp.float32)],
    ),
    # v7x: vision on TC0, text on TC1; harmless 2-step loop on v5e/v6e.
    compiler_params=pltpu.CompilerParams(dimension_semantics=("parallel",)),
)


# ------------------------------- JAX-side glue -------------------------------
def extract_patches_nchw(pixel_values):
    # (B, C, H, W) -> (B, P, C*ph*pw) with (C, kh, kw) flattening order,
    # identical to a Conv2d(kernel=stride=PATCH) patch embedding.
    # TODO(synk): at real resolutions fuse this into the kernel via the patch-grid
    #             index_map instead of materializing the transpose in HBM.
    b, c, h, w = pixel_values.shape
    x = pixel_values.reshape(b, c, h // PATCH, PATCH, w // PATCH, PATCH)
    x = jnp.transpose(x, (0, 2, 4, 1, 3, 5))          # (B, Hp, Wp, C, ph, pw)
    return x.reshape(b, (h // PATCH) * (w // PATCH), c * PATCH * PATCH)


def _pad_tokens(x, t_item):
    # (B, t, f) -> (B*t_item, f): zero-pad each item's token rows to t_item rows
    # so token 0 of item i sits at row i*t_item for both modalities.
    b, t, f = x.shape
    return jnp.pad(x, ((0, 0), (0, t_item - t), (0, 0))).reshape(b * t_item, f)


@jax.jit
def siglip_wrapper_forward(params, pixel_values, input_ids, attention_mask, task_ids):
    # method='third': task embeds are appended AFTER the patch tokens, and the
    # pooled token is index 0, so they never reach the output of this
    # attention-free encoder (see TODO at top).
    del task_ids
    del attention_mask  # TODO(synk): unused by the synthetic (attention-free) text encoder
    vis_in = _pad_tokens(extract_patches_nchw(pixel_values), T_ITEM)        # (T, F_IN)
    # text token embedding as an exact one-hot matmul inside the fused kernel,
    # widened directly to F_IN columns (embed-weight rows >= VOCAB are zero).
    # TODO(synk): replace with a scalar-prefetch gather at real vocab sizes.
    txt_onehot = jax.nn.one_hot(input_ids.reshape(B, S), F_IN, dtype=jnp.float32)
    txt_in = _pad_tokens(txt_onehot, T_ITEM)                                 # (T, F_IN)
    xin = jnp.stack([vis_in, txt_in])                                        # (2, T, F_IN)
    feats = _fused_encoders(xin, params["wemb"], params["pos"],
                            params["w1"], params["w2"])                      # (2, B, D)
    return feats[0], feats[1]


# ------------------------------- parameter init -------------------------------
def init_params(key):
    ks = jax.random.split(key, 10)
    scale = 0.02
    patch_w = scale * jax.random.normal(ks[0], (CP, D), jnp.float32)
    patch_b = scale * jax.random.normal(ks[1], (1, D), jnp.float32)
    vis_pos = scale * jax.random.normal(ks[2], (P, D), jnp.float32)
    vis_w1 = scale * jax.random.normal(ks[3], (D, HID), jnp.float32)
    vis_w2 = scale * jax.random.normal(ks[4], (HID, D), jnp.float32)
    txt_emb = scale * jax.random.normal(ks[5], (VOCAB, D), jnp.float32)
    txt_pos = scale * jax.random.normal(ks[6], (S, D), jnp.float32)
    txt_w1 = scale * jax.random.normal(ks[7], (D, HID), jnp.float32)
    txt_w2 = scale * jax.random.normal(ks[8], (HID, D), jnp.float32)

    # ---- fold / pad / stack once at init (not per forward) ----
    # embed weights padded to the shared contraction width and stacked on the
    # modality axis; all-zero MLP biases are dropped entirely.
    wemb = jnp.stack([
        patch_w,                                               # (F_IN, D)
        jnp.pad(txt_emb, ((0, F_IN - VOCAB), (0, 0))),         # (F_IN, D)
    ])
    # position embeddings pre-tiled over the batch; patch_b folded into the
    # vision rows; vision padded from P to T_ITEM tokens per item.
    vis_pos_item = jnp.pad(vis_pos + patch_b, ((0, T_ITEM - P), (0, 0)))   # (T_ITEM, D)
    txt_pos_item = jnp.pad(txt_pos, ((0, T_ITEM - S), (0, 0)))             # (T_ITEM, D)
    pos = jnp.stack([
        jnp.tile(vis_pos_item, (B, 1)),                        # (T, D)
        jnp.tile(txt_pos_item, (B, 1)),                        # (T, D)
    ])
    w1 = jnp.stack([vis_w1, txt_w1])                           # (2, D, HID)
    w2 = jnp.stack([vis_w2, txt_w2])                           # (2, HID, D)

    return {
        "wemb": wemb, "pos": pos, "w1": w1, "w2": w2,
        # wrapper parameters: nn.ModuleList of NUM_EMBEDS nn.Embedding(NUM_TASKS, D).
        # Kept for module parity; unused in forward since method='third' pools
        # patch token 0 (task embeds are appended after the patch tokens).
        "task_tables": scale * jax.random.normal(
            ks[9], (NUM_EMBEDS, NUM_TASKS, D), jnp.float32),
    }


# ------------------------------------ main ------------------------------------
if __name__ == "__main__":
    key = jax.random.PRNGKey(0)
    k_param, k_px, k_ids, k_task = jax.random.split(key, 4)

    params = init_params(k_param)
    pixel_values = jax.random.normal(k_px, (B, C, H, W_IMG), jnp.float32)
    input_ids = jax.random.randint(k_ids, (B, S), 0, VOCAB, jnp.int32)
    attention_mask = jnp.ones((B, S), jnp.int32)
    task_ids = jax.random.randint(k_task, (B,), 0, NUM_TASKS, jnp.int32)

    img_feat, txt_feat = siglip_wrapper_forward(
        params, pixel_values, input_ids, attention_mask, task_ids)
    jax.block_until_ready((img_feat, txt_feat))

    assert img_feat.shape == (B, D) and txt_feat.shape == (B, D)
    # features are L2-normalized
    assert jnp.allclose(jnp.linalg.norm(img_feat, axis=-1), 1.0, atol=1e-5)
    assert jnp.allclose(jnp.linalg.norm(txt_feat, axis=-1), 1.0, atol=1e-5)
    print("KERNEL_OK")
</pallas_src>

<mosaic_0001>
module attributes {stable_mosaic.version = 11 : i64} {
  func.func @encoder_kernel(%arg0: i32, %arg1: memref<1x16x192xf32, #tpu.memory_space<vmem>>, %arg2: memref<1x192x32xf32, #tpu.memory_space<vmem>>, %arg3: memref<1x16x32xf32, #tpu.memory_space<vmem>>, %arg4: memref<1x32x64xf32, #tpu.memory_space<vmem>>, %arg5: memref<1x64x32xf32, #tpu.memory_space<vmem>>, %arg6: memref<1x2x32xf32, #tpu.memory_space<vmem>>, %arg7: memref<16x32xf32, #tpu.memory_space<vmem>>) attributes {dimension_semantics = [#tpu.dimension_semantics<parallel>], iteration_bounds = array<i64: 2>, scalar_prefetch = 0 : i64, scratch_operands = 1 : i64, tpu.core_type = #tpu.core_type<tc>, window_params = [{transform_indices = @transform_0, window_bounds = array<i64: 1, 16, 192>}, {transform_indices = @transform_1, window_bounds = array<i64: 1, 192, 32>}, {transform_indices = @transform_2, window_bounds = array<i64: 1, 16, 32>}, {transform_indices = @transform_3, window_bounds = array<i64: 1, 32, 64>}, {transform_indices = @transform_4, window_bounds = array<i64: 1, 64, 32>}, {transform_indices = @transform_5, window_bounds = array<i64: 1, 2, 32>}]} {
    %c0 = arith.constant 0 : index
    %c0_0 = arith.constant 0 : index
    %c0_1 = arith.constant 0 : index
    %0 = vector.load %arg1[%c0, %c0_0, %c0_1] : memref<1x16x192xf32, #tpu.memory_space<vmem>>, vector<1x16x192xf32>
    %1 = vector.shape_cast %0 : vector<1x16x192xf32> to vector<16x192xf32>
    %c0_2 = arith.constant 0 : index
    %c0_3 = arith.constant 0 : index
    %c0_4 = arith.constant 0 : index
    %2 = vector.load %arg2[%c0_2, %c0_3, %c0_4] : memref<1x192x32xf32, #tpu.memory_space<vmem>>, vector<1x192x32xf32>
    %3 = vector.shape_cast %2 : vector<1x192x32xf32> to vector<192x32xf32>
    %cst = arith.constant dense<0.000000e+00> : vector<16x32xf32>
    %4 = tpu.matmul %1, %3, %cst {dimension_numbers = #tpu.dot_dimension_numbers<[1], [0], [0], [1], [0, 0, 1, 1], [], []>} : vector<16x192xf32>, vector<192x32xf32>, vector<16x32xf32> -> vector<16x32xf32>
    %c0_5 = arith.constant 0 : index
    %c0_6 = arith.constant 0 : index
    %c0_7 = arith.constant 0 : index
    %5 = vector.load %arg3[%c0_5, %c0_6, %c0_7] : memref<1x16x32xf32, #tpu.memory_space<vmem>>, vector<1x16x32xf32>
    %6 = vector.shape_cast %5 : vector<1x16x32xf32> to vector<16x32xf32>
    %7 = arith.addf %4, %6 : vector<16x32xf32>
    %c0_8 = arith.constant 0 : index
    %c0_9 = arith.constant 0 : index
    %c0_10 = arith.constant 0 : index
    %8 = vector.load %arg4[%c0_8, %c0_9, %c0_10] : memref<1x32x64xf32, #tpu.memory_space<vmem>>, vector<1x32x64xf32>
    %9 = vector.shape_cast %8 : vector<1x32x64xf32> to vector<32x64xf32>
    %cst_11 = arith.constant dense<0.000000e+00> : vector<16x64xf32>
    %10 = tpu.matmul %7, %9, %cst_11 {dimension_numbers = #tpu.dot_dimension_numbers<[1], [0], [0], [1], [0, 0, 1, 1], [], []>} : vector<16x32xf32>, vector<32x64xf32>, vector<16x64xf32> -> vector<16x64xf32>
    %11 = arith.mulf %10, %10 : vector<16x64xf32>
    %12 = arith.mulf %10, %11 : vector<16x64xf32>
    %cst_12 = arith.constant 4.471500e-02 : f32
    %13 = vector.broadcast %cst_12 : f32 to vector<16x64xf32>
    %14 = arith.mulf %13, %12 : vector<16x64xf32>
    %15 = arith.addf %10, %14 : vector<16x64xf32>
    %cst_13 = arith.constant 0.797884583 : f32
    %16 = vector.broadcast %cst_13 : f32 to vector<16x64xf32>
    %17 = arith.mulf %16, %15 : vector<16x64xf32>
    %18 = math.tanh %17 : vector<16x64xf32>
    %cst_14 = arith.constant 1.000000e+00 : f32
    %19 = vector.broadcast %cst_14 : f32 to vector<16x64xf32>
    %20 = arith.addf %19, %18 : vector<16x64xf32>
    %cst_15 = arith.constant 5.000000e-01 : f32
    %21 = vector.broadcast %cst_15 : f32 to vector<16x64xf32>
    %22 = arith.mulf %21, %20 : vector<16x64xf32>
    %23 = arith.mulf %10, %22 : vector<16x64xf32>
    %c0_16 = arith.constant 0 : index
    %c0_17 = arith.constant 0 : index
    %c0_18 = arith.constant 0 : index
    %24 = vector.load %arg5[%c0_16, %c0_17, %c0_18] : memref<1x64x32xf32, #tpu.memory_space<vmem>>, vector<1x64x32xf32>
    %25 = vector.shape_cast %24 : vector<1x64x32xf32> to vector<64x32xf32>
    %cst_19 = arith.constant dense<0.000000e+00> : vector<16x32xf32>
    %26 = tpu.matmul %23, %25, %cst_19 {dimension_numbers = #tpu.dot_dimension_numbers<[1], [0], [0], [1], [0, 0, 1, 1], [], []>} : vector<16x64xf32>, vector<64x32xf32>, vector<16x32xf32> -> vector<16x32xf32>
    %27 = arith.addf %7, %26 : vector<16x32xf32>
    %c0_20 = arith.constant 0 : index
    %c0_21 = arith.constant 0 : index
    %28 = vector.load %arg7[%c0_20, %c0_21] : memref<16x32xf32, #tpu.memory_space<vmem>>, vector<16x32xf32>
    tpu.vector_store %arg7[%c0_20, %c0_21], %27 {strides = array<i32>} : memref<16x32xf32, #tpu.memory_space<vmem>>, vector<16x32xf32>,
    %c0_22 = arith.constant 0 : index
    %c0_23 = arith.constant 0 : index
    %29 = tpu.strided_load %arg7[%c0_22, %c0_23] {strides = array<i32: 8, 1>} : memref<16x32xf32, #tpu.memory_space<vmem>>, vector<2x32xf32>
    %30 = arith.mulf %29, %29 : vector<2x32xf32>
    %cst_24 = arith.constant dense<0.000000e+00> : vector<2xf32>
    %31 = vector.multi_reduction <add>, %30, %cst_24 [1] : vector<2x32xf32> to vector<2xf32>
    %32 = vector.shape_cast %31 : vector<2xf32> to vector<2x1xf32>
    %cst_25 = arith.constant 1.000000e-24 : f32
    %33 = vector.broadcast %cst_25 : f32 to vector<2x1xf32>
    %34 = arith.maximumf %32, %33 : vector<2x1xf32>
    %35 = math.rsqrt %34 : vector<2x1xf32>
    %36 = vector.broadcast %35 : vector<2x1xf32> to vector<2x32xf32>
    %37 = arith.mulf %29, %36 : vector<2x32xf32>
    %c0_26 = arith.constant 0 : index
    %c0_27 = arith.constant 0 : index
    %c0_28 = arith.constant 0 : index
    %38 = vector.load %arg6[%c0_26, %c0_27, %c0_28] : memref<1x2x32xf32, #tpu.memory_space<vmem>>, vector<1x2x32xf32>
    %39 = vector.shape_cast %38 : vector<1x2x32xf32> to vector<2x32xf32>
    %40 = vector.shape_cast %37 : vector<2x32xf32> to vector<1x2x32xf32>
    tpu.vector_store %arg6[%c0_26, %c0_27, %c0_28], %40 {strides = array<i32>} : memref<1x2x32xf32, #tpu.memory_space<vmem>>, vector<1x2x32xf32>,
    return
  }
  func.func @transform_0(%arg0: i32) -> (i32, i32, i32) {
    %c0_i32 = arith.constant 0 : i32
    %c0_i32_0 = arith.constant 0 : i32
    %c0_i32_1 = arith.constant 0 : i32
    return %arg0, %c0_i32, %c0_i32_0 : i32, i32, i32
  }
  func.func @transform_1(%arg0: i32) -> (i32, i32, i32) {
    %c0_i32 = arith.constant 0 : i32
    %c0_i32_0 = arith.constant 0 : i32
    %c0_i32_1 = arith.constant 0 : i32
    return %arg0, %c0_i32, %c0_i32_0 : i32, i32, i32
  }
  func.func @transform_2(%arg0: i32) -> (i32, i32, i32) {
    %c0_i32 = arith.constant 0 : i32
    %c0_i32_0 = arith.constant 0 : i32
    %c0_i32_1 = arith.constant 0 : i32
    return %arg0, %c0_i32, %c0_i32_0 : i32, i32, i32
  }
  func.func @transform_3(%arg0: i32) -> (i32, i32, i32) {
    %c0_i32 = arith.constant 0 : i32
    %c0_i32_0 = arith.constant 0 : i32
    %c0_i32_1 = arith.constant 0 : i32
    return %arg0, %c0_i32, %c0_i32_0 : i32, i32, i32
  }
  func.func @transform_4(%arg0: i32) -> (i32, i32, i32) {
    %c0_i32 = arith.constant 0 : i32
    %c0_i32_0 = arith.constant 0 : i32
    %c0_i32_1 = arith.constant 0 : i32
    return %arg0, %c0_i32, %c0_i32_0 : i32, i32, i32
  }
  func.func @transform_5(%arg0: i32) -> (i32, i32, i32) {
    %c0_i32 = arith.constant 0 : i32
    %c0_i32_0 = arith.constant 0 : i32
    %c0_i32_1 = arith.constant 0 : i32
    return %arg0, %c0_i32, %c0_i32_0 : i32, i32, i32
  }
}

</mosaic_0001>

<llo_original>
// kernel: siglip_wrapper_forward.1
$region0: #{siglip_wrapper_forward.1}
  #allocation0 [shape = 'u32[]', space=smem, size = 0x4, offset = 0x4, fixed_abs, tag = 'smem constant byte address 0x4 - core index']
  #allocation1 [shape = 'u32[72,128]{1,0:T(1,128)}', space=vmem, size = 0x9000, scoped, tag = 'internal scratch']
  #allocation2 [shape = 'f32[16,32]{1,0:T(8,128)}', space=vmem, size = 0x2000, scoped, tag = 'scratch operand']
  %s0 = inlined_call_operand.vmem [shape: f32[2,16,192], index: 0, kind: input, shape index: {}]
  %s1 = inlined_call_operand.vmem [shape: f32[2,192,32], index: 1, kind: input, shape index: {}]
  %s2 = inlined_call_operand.vmem [shape: f32[2,16,32], index: 2, kind: input, shape index: {}]
  %s3 = inlined_call_operand.vmem [shape: f32[2,32,64], index: 3, kind: input, shape index: {}]
  %s4 = inlined_call_operand.vmem [shape: f32[2,64,32], index: 4, kind: input, shape index: {}]
  %s5 = inlined_call_operand.vmem [shape: f32[2,2,32], index: 5, kind: output, shape index: {}]
  %s6 = sld [smem:[#allocation0]]
  $region53: #{siglip_wrapper_forward.1} parent=0
    _
  %s8 = ssub.s32 1, %s6
  %s9 = scalar_select 0, %s8, %s6
  loop: start=0, step=1, limit=4
  $region2: #{siglip_wrapper_forward.1} parent=0 // loop_pre_header
    _
  $region3: #{siglip_wrapper_forward.1} parent=0 // loop_header
    %s11 = sphi 0, %s15
    %p12 = scmp.ge.s32.totalorder %s11, 4
    %s21 = sphi 0, %s23
    %s24 = sphi 0, %s21
    %s25 = sphi 0, %s24
    %s41 = sphi 0, %s25
    %s47 = sphi 0, %s49
    %s50 = sphi 0, %s47
    %s51 = sphi 0, %s50
    %s67 = sphi 0, %s51
    %s73 = sphi 0, %s75
    %s76 = sphi 0, %s73
    %s77 = sphi 0, %s76
    %s93 = sphi 0, %s77
    %s99 = sphi 0, %s101
    %s102 = sphi 0, %s99
    %s103 = sphi 0, %s102
    %s119 = sphi 0, %s103
    %s125 = sphi 0, %s127
    %s128 = sphi 0, %s125
    %s129 = sphi 0, %s128
    %s145 = sphi 0, %s129
    %s151 = sphi 0, %s153
    %s154 = sphi 0, %s151
    %s155 = sphi 0, %s154
    %s171 = sphi 0, %s155
  $region4: #{siglip_wrapper_forward.1} parent=0 // loop_header_branch
    %14 = sbr.rel (%p12) target = $region8
  $region5: #{siglip_wrapper_forward.1} parent=0 // loop_body
    %s16 = ssub.s32 %s11, 1
    %s17 = ssub.s32 %s11, 2
    %s18 = sadd.s32 %s11, 1
    %s19 = ssub.s32 %s11, %s18
    %p20 = scmp.eq.s32.totalorder %s19, 0
    %s22 = sadd.s32 %s21, 1
    %s23 = scalar_select %p20, %s21, %s22
    %p26 = pneg %p20
    %p27 = scmp.eq.s32.totalorder %s11, 1
    %p28 = por %p26, %p27
    %p29 = scmp.ne.s32.totalorder %s21, %s24
    %p30 = scmp.eq.s32.totalorder %s11, 0
    %p31 = por %p29, %p30
    %p32 = scmp.ne.s32.totalorder %s21, %s24
    %p33 = scmp.eq.s32.totalorder %s16, 1
    %p34 = por %p32, %p33
    %p35 = scmp.ne.s32.totalorder %s24, %s25
    %p36 = scmp.eq.s32.totalorder %s16, 0
    %p37 = por %p35, %p36
    %p38 = scmp.ne.s32.totalorder %s24, %s25
    %p39 = scmp.eq.s32.totalorder %s17, 1
    %p40 = por %p38, %p39
    %p42 = scmp.ne.s32.totalorder %s25, %s41
    %p43 = scmp.eq.s32.totalorder %s17, 0
    %p44 = por %p42, %p43
    %s45 = ssub.s32 %s11, %s18
    %p46 = scmp.eq.s32.totalorder %s45, 0
    %s48 = sadd.s32 %s47, 1
    %s49 = scalar_select %p46, %s47, %s48
    %p52 = pneg %p46
    %p53 = scmp.eq.s32.totalorder %s11, 1
    %p54 = por %p52, %p53
    %p55 = scmp.ne.s32.totalorder %s47, %s50
    %p56 = scmp.eq.s32.totalorder %s11, 0
    %p57 = por %p55, %p56
    %p58 = scmp.ne.s32.totalorder %s47, %s50
    %p59 = scmp.eq.s32.totalorder %s16, 1
    %p60 = por %p58, %p59
    %p61 = scmp.ne.s32.totalorder %s50, %s51
    %p62 = scmp.eq.s32.totalorder %s16, 0
    %p63 = por %p61, %p62
    %p64 = scmp.ne.s32.totalorder %s50, %s51
    %p65 = scmp.eq.s32.totalorder %s17, 1
    %p66 = por %p64, %p65
    %p68 = scmp.ne.s32.totalorder %s51, %s67
    %p69 = scmp.eq.s32.totalorder %s17, 0
    %p70 = por %p68, %p69
    %s71 = ssub.s32 %s11, %s18
    %p72 = scmp.eq.s32.totalorder %s71, 0
    %s74 = sadd.s32 %s73, 1
    %s75 = scalar_select %p72, %s73, %s74
    %p78 = pneg %p72
    %p79 = scmp.eq.s32.totalorder %s11, 1
    %p80 = por %p78, %p79
    %p81 = scmp.ne.s32.totalorder %s73, %s76
    %p82 = scmp.eq.s32.totalorder %s11, 0
    %p83 = por %p81, %p82
    %p84 = scmp.ne.s32.totalorder %s73, %s76
    %p85 = scmp.eq.s32.totalorder %s16, 1
    %p86 = por %p84, %p85
    %p87 = scmp.ne.s32.totalorder %s76, %s77
    %p88 = scmp.eq.s32.totalorder %s16, 0
    %p89 = por %p87, %p88
    %p90 = scmp.ne.s32.totalorder %s76, %s77
    %p91 = scmp.eq.s32.totalorder %s17, 1
    %p92 = por %p90, %p91
    %p94 = scmp.ne.s32.totalorder %s77, %s93
    %p95 = scmp.eq.s32.totalorder %s17, 0
    %p96 = por %p94, %p95
    %s97 = ssub.s32 %s11, %s18
    %p98 = scmp.eq.s32.totalorder %s97, 0
    %s100 = sadd.s32 %s99, 1
    %s101 = scalar_select %p98, %s99, %s100
    %p104 = pneg %p98
    %p105 = scmp.eq.s32.totalorder %s11, 1
    %p106 = por %p104, %p105
    %p107 = scmp.ne.s32.totalorder %s99, %s102
    %p108 = scmp.eq.s32.totalorder %s11, 0
    %p109 = por %p107, %p108
    %p110 = scmp.ne.s32.totalorder %s99, %s102
    %p111 = scmp.eq.s32.totalorder %s16, 1
    %p112 = por %p110, %p111
    %p113 = scmp.ne.s32.totalorder %s102, %s103
    %p114 = scmp.eq.s32.totalorder %s16, 0
    %p115 = por %p113, %p114
    %p116 = scmp.ne.s32.totalorder %s102, %s103
    %p117 = scmp.eq.s32.totalorder %s17, 1
    %p118 = por %p116, %p117
    %p120 = scmp.ne.s32.totalorder %s103, %s119
    %p121 = scmp.eq.s32.totalorder %s17, 0
    %p122 = por %p120, %p121
    %s123 = ssub.s32 %s11, %s18
    %p124 = scmp.eq.s32.totalorder %s123, 0
    %s126 = sadd.s32 %s125, 1
    %s127 = scalar_select %p124, %s125, %s126
    %p130 = pneg %p124
    %p131 = scmp.eq.s32.totalorder %s11, 1
    %p132 = por %p130, %p131
    %p133 = scmp.ne.s32.totalorder %s125, %s128
    %p134 = scmp.eq.s32.totalorder %s11, 0
    %p135 = por %p133, %p134
    %p136 = scmp.ne.s32.totalorder %s125, %s128
    %p137 = scmp.eq.s32.totalorder %s16, 1
    %p138 = por %p136, %p137
    %p139 = scmp.ne.s32.totalorder %s128, %s129
    %p140 = scmp.eq.s32.totalorder %s16, 0
    %p141 = por %p139, %p140
    %p142 = scmp.ne.s32.totalorder %s128, %s129
    %p143 = scmp.eq.s32.totalorder %s17, 1
    %p144 = por %p142, %p143
    %p146 = scmp.ne.s32.totalorder %s129, %s145
    %p147 = scmp.eq.s32.totalorder %s17, 0
    %p148 = por %p146, %p147
    %s149 = ssub.s32 %s11, %s18
    %p150 = scmp.eq.s32.totalorder %s149, 0
    %s152 = sadd.s32 %s151, 1
    %s153 = scalar_select %p150, %s151, %s152
    %p156 = pneg %p150
    %p157 = scmp.eq.s32.totalorder %s11, 1
    %p158 = por %p156, %p157
    %p159 = scmp.ne.s32.totalorder %s151, %s154
    %p160 = scmp.eq.s32.totalorder %s11, 0
    %p161 = por %p159, %p160
    %p162 = scmp.ne.s32.totalorder %s151, %s154
    %p163 = scmp.eq.s32.totalorder %s16, 1
    %p164 = por %p162, %p163
    %p165 = scmp.ne.s32.totalorder %s154, %s155
    %p166 = scmp.eq.s32.totalorder %s16, 0
    %p167 = por %p165, %p166
    %p168 = scmp.ne.s32.totalorder %s154, %s155
    %p169 = scmp.eq.s32.totalorder %s17, 1
    %p170 = por %p168, %p169
    %p172 = scmp.ne.s32.totalorder %s155, %s171
    %p173 = scmp.eq.s32.totalorder %s17, 0
    %p174 = por %p172, %p173
    %p175 = scmp.le.s32.totalorder 1, %s11
    %p176 = scmp.lt.s32.totalorder %s11, 3
    %p177 = pnand %p175, %p176
    %p178 = pneg %p177
    // Predicated region
    $region9: #{siglip_wrapper_forward.1} parent=5 // pred_check
      _
    $region10: #{siglip_wrapper_forward.1} parent=5 // pred_check_branch
      %180 = sbr.rel (%p177) target = $region12
    $region11: #{siglip_wrapper_forward.1} parent=5 // pred_region
      %s181 = ssub.s32 %s11, 1
    $region12: #{siglip_wrapper_forward.1} parent=5 // pred_fallthru
      _
    %p182 = scmp.lt.s32.totalorder %s11, 2
    // Predicated region
    $region13: #{siglip_wrapper_forward.1} parent=5 // pred_check
      %p183 = pneg %p182
    $region14: #{siglip_wrapper_forward.1} parent=5 // pred_check_branch
      %185 = sbr.rel (%p183) target = $region16
    $region15: #{siglip_wrapper_forward.1} parent=5 // pred_region
      // Predicated region
      $region17: #{siglip_wrapper_forward.1} parent=15 // pred_check
        %p186 = pneg %p31
      $region18: #{siglip_wrapper_forward.1} parent=15 // pred_check_branch
        %188 = sbr.rel (%p186) target = $region20
      $region19: #{siglip_wrapper_forward.1} parent=15 // pred_region
        %p189 = scmp.lt.s32.totalorder %s11, 1
        %s190 = scalar_select %p189, %s11, 1
        %s191 = smul.addr %s190, 4
        %s192 = smul.addr %s191, 8
        %s193 = scalar_lea.vmem %s0, %s192
      $region20: #{siglip_wrapper_forward.1} parent=15 // pred_fallthru
        _
      // Predicated region
      $region21: #{siglip_wrapper_forward.1} parent=15 // pred_check
        %p194 = pneg %p57
      $region22: #{siglip_wrapper_forward.1} parent=15 // pred_check_branch
        %196 = sbr.rel (%p194) target = $region24
      $region23: #{siglip_wrapper_forward.1} parent=15 // pred_region
        %p197 = scmp.lt.s32.totalorder %s11, 1
        %s198 = scalar_select %p197, %s11, 1
        %s199 = smul.addr %s198, 24
        %s200 = smul.addr %s199, 8
        %s201 = scalar_lea.vmem %s1, %s200
      $region24: #{siglip_wrapper_forward.1} parent=15 // pred_fallthru
        _
      // Predicated region
      $region25: #{siglip_wrapper_forward.1} parent=15 // pred_check
        %p202 = pneg %p83
      $region26: #{siglip_wrapper_forward.1} parent=15 // pred_check_branch
        %204 = sbr.rel (%p202) target = $region28
      $region27: #{siglip_wrapper_forward.1} parent=15 // pred_region
        %p205 = scmp.lt.s32.totalorder %s11, 1
        %s206 = scalar_select %p205, %s11, 1
        %s207 = smul.addr %s206, 2
        %s208 = smul.addr %s207, 8
        %s209 = scalar_lea.vmem %s2, %s208
      $region28: #{siglip_wrapper_forward.1} parent=15 // pred_fallthru
        _
      // Predicated region
      $region29: #{siglip_wrapper_forward.1} parent=15 // pred_check
        %p210 = pneg %p109
      $region30: #{siglip_wrapper_forward.1} parent=15 // pred_check_branch
        %212 = sbr.rel (%p210) target = $region32
      $region31: #{siglip_wrapper_forward.1} parent=15 // pred_region
        %p213 = scmp.lt.s32.totalorder %s11, 1
        %s214 = scalar_select %p213, %s11, 1
        %s215 = smul.addr %s214, 4
        %s216 = smul.addr %s215, 8
        %s217 = scalar_lea.vmem %s3, %s216
      $region32: #{siglip_wrapper_forward.1} parent=15 // pred_fallthru
        _
      // Predicated region
      $region33: #{siglip_wrapper_forward.1} parent=15 // pred_check
        %p218 = pneg %p135
      $region34: #{siglip_wrapper_forward.1} parent=15 // pred_check_branch
        %220 = sbr.rel (%p218) target = $region36
      $region35: #{siglip_wrapper_forward.1} parent=15 // pred_region
        %p221 = scmp.lt.s32.totalorder %s11, 1
        %s222 = scalar_select %p221, %s11, 1
        %s223 = smul.addr %s222, 8
        %s224 = smul.addr %s223, 8
        %s225 = scalar_lea.vmem %s4, %s224
      $region36: #{siglip_wrapper_forward.1} parent=15 // pred_fallthru
        _
    $region16: #{siglip_wrapper_forward.1} parent=5 // pred_fallthru
      _
    %p226 = scmp.le.s32.totalorder 1, %s11
    %p227 = scmp.lt.s32.totalorder %s11, 3
    %p228 = pnand %p226, %p227
    %p229 = pneg %p228
    // Predicated region
    $region37: #{siglip_wrapper_forward.1} parent=5 // pred_check
      _
    $region38: #{siglip_wrapper_forward.1} parent=5 // pred_check_branch
      %231 = sbr.rel (%p228) target = $region40
    $region39: #{siglip_wrapper_forward.1} parent=5 // pred_region
      %s232 = ssub.s32 %s11, 1
      %p233 = scmp.lt.s32.totalorder %s16, 1
      %s234 = scalar_select %p233, %s16, 1
      %s235 = smul.addr %s234, 4
      %s236 = smul.addr %s235, 8
      %s237 = scalar_lea.vmem %s0, %s236
      %p238 = pneg %p37
      %p239 = pneg %p34
      %p240 = scmp.lt.s32.totalorder %s16, 1
      %s241 = scalar_select %p240, %s16, 1
      %s242 = smul.addr %s241, 24
      %s243 = smul.addr %s242, 8
      %s244 = scalar_lea.vmem %s1, %s243
      %p245 = pneg %p63
      %p246 = pneg %p60
      %p247 = scmp.lt.s32.totalorder %s16, 1
      %s248 = scalar_select %p247, %s16, 1
      %s249 = smul.addr %s248, 2
      %s250 = smul.addr %s249, 8
      %s251 = scalar_lea.vmem %s2, %s250
      %p252 = pneg %p89
      %p253 = pneg %p86
      %p254 = scmp.lt.s32.totalorder %s16, 1
      %s255 = scalar_select %p254, %s16, 1
      %s256 = smul.addr %s255, 4
      %s257 = smul.addr %s256, 8
      %s258 = scalar_lea.vmem %s3, %s257
      %p259 = pneg %p115
      %p260 = pneg %p112
      %p261 = scmp.lt.s32.totalorder %s16, 1
      %s262 = scalar_select %p261, %s16, 1
      %s263 = smul.addr %s262, 8
      %s264 = smul.addr %s263, 8
      %s265 = scalar_lea.vmem %s4, %s264
      %p266 = pneg %p141
      %p267 = pneg %p138
      %p268 = pneg %p167
      %p269 = pneg %p164
      %p270 = scmp.lt.s32.totalorder %s16, 1
      %s271 = scalar_select %p270, %s16, 1
      %s272 = smul.addr %s271, 2
      %s273 = scalar_lea.vmem %s5, %s272
      %p274 = scmp.lt.s32.totalorder %s16, 1
      %s275 = scalar_select %p274, %s16, 1
      %s276 = smul.addr %s275, 4
      %s277 = smul.addr %s276, 8
      %s278 = scalar_lea.vmem %s0, %s277
      %p279 = scmp.lt.s32.totalorder %s16, 1
      %s280 = scalar_select %p279, %s16, 1
      %s281 = smul.addr %s280, 24
      %s282 = smul.addr %s281, 8
      %s283 = scalar_lea.vmem %s1, %s282
      %p284 = scmp.lt.s32.totalorder %s16, 1
      %s285 = scalar_select %p284, %s16, 1
      %s286 = smul.addr %s285, 2
      %s287 = smul.addr %s286, 8
      %s288 = scalar_lea.vmem %s2, %s287
      %p289 = scmp.lt.s32.totalorder %s16, 1
      %s290 = scalar_select %p289, %s16, 1
      %s291 = smul.addr %s290, 4
      %s292 = smul.addr %s291, 8
      %s293 = scalar_lea.vmem %s3, %s292
      %p294 = scmp.lt.s32.totalorder %s16, 1
      %s295 = scalar_select %p294, %s16, 1
      %s296 = smul.addr %s295, 8
      %s297 = smul.addr %s296, 8
      %s298 = scalar_lea.vmem %s4, %s297
      %p299 = scmp.lt.s32.totalorder %s16, 1
      %s300 = scalar_select %p299, %s16, 1
      %s301 = smul.addr %s300, 2
      %s302 = scalar_lea.vmem %s5, %s301
      %v303 = vld [vmem:[%s278] sm:$0xff]
      %v304 = vld [vmem:[%s278 + $0x8] sm:$0xff]
      %v305 = vld [vmem:[%s278 + $0x10] sm:$0xff]
      %v306 = vld [vmem:[%s278 + $0x18] sm:$0xff]
      %v307 = vld [vmem:[%s283] sm:$0xff]
      %v308 = vld [vmem:[%s283 + $0x8] sm:$0xff]
      %v309 = vld [vmem:[%s283 + $0x10] sm:$0xff]
      %v310 = vld [vmem:[%s283 + $0x18] sm:$0xff]
      %v311 = vld [vmem:[%s283 + $0x20] sm:$0xff]
      %v312 = vld [vmem:[%s283 + $0x28] sm:$0xff]
      %v313 = vld [vmem:[%s283 + $0x30] sm:$0xff]
      %v314 = vld [vmem:[%s283 + $0x38] sm:$0xff]
      %v315 = vld [vmem:[%s283 + $0x40] sm:$0xff]
      %v316 = vld [vmem:[%s283 + $0x48] sm:$0xff]
      %v317 = vld [vmem:[%s283 + $0x50] sm:$0xff]
      %v318 = vld [vmem:[%s283 + $0x58] sm:$0xff]
      %v319 = vld [vmem:[%s283 + $0x60] sm:$0xff]
      %v320 = vld [vmem:[%s283 + $0x68] sm:$0xff]
      %v321 = vld [vmem:[%s283 + $0x70] sm:$0xff]
      %v322 = vld [vmem:[%s283 + $0x78] sm:$0xff]
      %v323 = vld [vmem:[%s283 + $0x80] sm:$0xff]
      %v324 = vld [vmem:[%s283 + $0x88] sm:$0xff]
      %v325 = vld [vmem:[%s283 + $0x90] sm:$0xff]
      %v326 = vld [vmem:[%s283 + $0x98] sm:$0xff]
      %v327 = vld [vmem:[%s283 + $0xa0] sm:$0xff]
      %v328 = vld [vmem:[%s283 + $0xa8] sm:$0xff]
      %v329 = vld [vmem:[%s283 + $0xb0] sm:$0xff]
      %v330 = vld [vmem:[%s283 + $0xb8] sm:$0xff]
      %v331 = vld [vmem:[%s288] sm:$0xff]
      %v332 = vld [vmem:[%s288 + $0x8] sm:$0xff]
      %vm333 = vcmask 523264
      %v335 = vsel %vm333, %v304, 0
      %v338 = vsel %vm333, %v306, 0
      %340 = vmatpush.msra.mxu0 %v322
      %341 = vmatpush.msra.mxu0 %v321
      %342 = vmatpush.msra.mxu0 %v320
      %343 = vmatpush.msra.mxu0 %v319
      %344 = vmatpush.msra.mxu0 %v318
      %345 = vmatpush.msra.mxu0 %v317
      %346 = vmatpush.msra.mxu0 %v316
      %347 = vmatpush.msra.mxu0 %v315
      %348 = vmatpush.msra.mxu0 %v314
      %349 = vmatpush.msra.mxu0 %v313
      %350 = vmatpush.msra.mxu0 %v312
      %351 = vmatpush.msra.mxu0 %v311
      %352 = vmatpush.msra.mxu0 %v310
      %353 = vmatpush.msra.mxu0 %v309
      %354 = vmatpush.msra.mxu0 %v308
      %355 = vmatpush.msra.mxu0 %v307
      %356 = vmatmul.f32.gmra.mxu0 %v303
      %v357 = vpop.f32.mrf.mxu0
      %v358 = vadd.f32 %v331, %v357
      %359 = vmatmul.f32.gmra.mxu0 %v305
      %v360 = vpop.f32.mrf.mxu0
      %v361 = vadd.f32 %v332, %v360
      %362 = vdwg.mxu0
      %363 = vmatpush.msra.mxu0 0.0
      %364 = vmatpush.msra.mxu0 0.0
      %365 = vmatpush.msra.mxu0 0.0
      %366 = vmatpush.msra.mxu0 0.0
      %367 = vmatpush.msra.mxu0 0.0
      %368 = vmatpush.msra.mxu0 0.0
      %369 = vmatpush.msra.mxu0 0.0
      %370 = vmatpush.msra.mxu0 0.0
      %371 = vmatpush.msra.mxu0 %v330
      %372 = vmatpush.msra.mxu0 %v329
      %373 = vmatpush.msra.mxu0 %v328
      %374 = vmatpush.msra.mxu0 %v327
      %375 = vmatpush.msra.mxu0 %v326
      %376 = vmatpush.msra.mxu0 %v325
      %377 = vmatpush.msra.mxu0 %v324
      %378 = vmatpush.msra.mxu0 %v323
      %379 = vmatmul.f32.gmra.mxu0 %v335
      %v380 = vpop.f32.mrf.mxu0
      %v381 = vadd.f32 %v358, %v380
      %382 = vmatmul.f32.gmra.mxu0 %v338
      %v383 = vpop.f32.mrf.mxu0
      %v384 = vadd.f32 %v361, %v383
      %385 = vdwg.mxu0
      %v386 = vld [vmem:[%s293] sm:$0xff]
      %v387 = vld [vmem:[%s293 + $0x8] sm:$0xff]
      %v388 = vld [vmem:[%s293 + $0x10] sm:$0xff]
      %v389 = vld [vmem:[%s293 + $0x18] sm:$0xff]
      %vm390 = vcmask 261120
      %v392 = vsel %vm390, %v381, 0
      %v395 = vsel %vm390, %v384, 0
      %397 = vmatpush.msra.mxu0 0.0
      %398 = vmatpush.msra.mxu0 0.0
      %399 = vmatpush.msra.mxu0 0.0
      %400 = vmatpush.msra.mxu0 0.0
      %401 = vmatpush.msra.mxu0 0.0
      %402 = vmatpush.msra.mxu0 0.0
      %403 = vmatpush.msra.mxu0 0.0
      %404 = vmatpush.msra.mxu0 0.0
      %405 = vmatpush.msra.mxu0 0.0
      %406 = vmatpush.msra.mxu0 0.0
      %407 = vmatpush.msra.mxu0 0.0
      %408 = vmatpush.msra.mxu0 0.0
      %409 = vmatpush.msra.mxu0 %v389
      %410 = vmatpush.msra.mxu0 %v388
      %411 = vmatpush.msra.mxu0 %v387
      %412 = vmatpush.msra.mxu0 %v386
      %413 = vmatmul.f32.gmra.mxu0 %v392
      %v414 = vpop.f32.mrf.mxu0
      %v415 = vadd.f32 0.0, %v414
      %416 = vmatmul.f32.gmra.mxu0 %v395
      %v417 = vpop.f32.mrf.mxu0
      %v418 = vadd.f32 0.0, %v417
      %419 = vdwg.mxu0
      %v420 = vmul.f32 %v415, %v415
      %v421 = vmul.f32 %v418, %v418
      %v422 = vmul.f32 %v415, %v420
      %v423 = vmul.f32 %v418, %v421
      %v424 = vmul.f32 %v422, 0.044715
      %v425 = vmul.f32 %v423, 0.044715
      %v426 = vadd.f32 %v415, %v424
      %v427 = vadd.f32 %v418, %v425
      %v428 = vmul.f32 %v426, 0.7978846
      %v429 = vmul.f32 %v427, 0.7978846
      %v430 = vtanh.pop %v428
      %v431 = vtanh.pop %v429
      %v432 = vadd.f32 %v430, 1.0
      %v433 = vadd.f32 %v431, 1.0
      %v434 = vmul.f32 %v432, 0.5
      %v435 = vmul.f32 %v433, 0.5
      %v436 = vmul.f32 %v415, %v434
      %v437 = vmul.f32 %v418, %v435
      %v438 = vld [vmem:[%s298] sm:$0xff]
      %v439 = vld [vmem:[%s298 + $0x8] sm:$0xff]
      %v440 = vld [vmem:[%s298 + $0x10] sm:$0xff]
      %v441 = vld [vmem:[%s298 + $0x18] sm:$0xff]
      %v442 = vld [vmem:[%s298 + $0x20] sm:$0xff]
      %v443 = vld [vmem:[%s298 + $0x28] sm:$0xff]
      %v444 = vld [vmem:[%s298 + $0x30] sm:$0xff]
      %v445 = vld [vmem:[%s298 + $0x38] sm:$0xff]
      %v447 = vsel %vm333, %v436, 0
      %v450 = vsel %vm333, %v437, 0
      %452 = vmatpush.msra.mxu0 0.0
      %453 = vmatpush.msra.mxu0 0.0
      %454 = vmatpush.msra.mxu0 0.0
      %455 = vmatpush.msra.mxu0 0.0
      %456 = vmatpush.msra.mxu0 0.0
      %457 = vmatpush.msra.mxu0 0.0
      %458 = vmatpush.msra.mxu0 0.0
      %459 = vmatpush.msra.mxu0 0.0
      %460 = vmatpush.msra.mxu0 %v445
      %461 = vmatpush.msra.mxu0 %v444
      %462 = vmatpush.msra.mxu0 %v443
      %463 = vmatpush.msra.mxu0 %v442
      %464 = vmatpush.msra.mxu0 %v441
      %465 = vmatpush.msra.mxu0 %v440
      %466 = vmatpush.msra.mxu0 %v439
      %467 = vmatpush.msra.mxu0 %v438
      %468 = vmatmul.f32.gmra.mxu0 %v447
      %v469 = vpop.f32.mrf.mxu0
      %v470 = vadd.f32 0.0, %v469
      %471 = vmatmul.f32.gmra.mxu0 %v450
      %v472 = vpop.f32.mrf.mxu0
      %v473 = vadd.f32 0.0, %v472
      %474 = vdwg.mxu0
      %v475 = vadd.f32 %v381, %v470
      %v476 = vadd.f32 %v384, %v473
      %477 = vst.msk [vmem:[#allocation2] sm:$0xff] %vm390, %v475
      %478 = vst.msk [vmem:[#allocation2 + $0x8] sm:$0xff] %vm390, %v476
      %v479 = vld [vmem:[#allocation2] ss:$8 sm:$0x3]
      %v480 = vmul.f32 %v479, %v479
      %vm481 = vcmask 254976
      %v482 = vsel %vm481, %v480, 0.0
      %483 = vadd.xlane.f32.xlu0 %v482
      %v484 = vpop.xlane.xlu0 %483
      %v485 = vmax.f32 %v484, 1e-24
      %v486 = vrsqrt.pop %v485
      %v487 = vmul.f32 %v486, %v485
      %v488 = vmul.f32 %v487, %v486
      %v489 = vmul.f32 0.5, %v488
      %v490 = vsub.f32 1.5, %v489
      %v491 = vmul.f32 %v486, %v490
      %vm492 = vweird.f32 %v485
      %vm493 = vweird.f32 %v486
      %vm494 = vmor %vm492, %vm493
      %v495 = vsel %vm494, %v486, %v491
      %v496 = vmul.f32 %v479, %v495
      %497 = vst.msk [vmem:[%s302] sm:$0x3] %vm481, %v496
      %p498 = scmp.lt.s32.totalorder %s16, 1
      %s499 = scalar_select %p498, %s16, 1
      %s500 = smul.addr %s499, 2
      %s501 = scalar_lea.vmem %s5, %s500
      // Predicated region
      $region41: #{siglip_wrapper_forward.1} parent=39 // pred_check
        %p502 = pneg %p164
      $region42: #{siglip_wrapper_forward.1} parent=39 // pred_check_branch
        %504 = sbr.rel (%p502) target = $region44
      $region43: #{siglip_wrapper_forward.1} parent=39 // pred_region
        _
      $region44: #{siglip_wrapper_forward.1} parent=39 // pred_fallthru
        _
    $region40: #{siglip_wrapper_forward.1} parent=5 // pred_fallthru
      _
    %p505 = scmp.le.s32.totalorder 2, %s11
    // Predicated region
    $region45: #{siglip_wrapper_forward.1} parent=5 // pred_check
      %p506 = pneg %p505
    $region46: #{siglip_wrapper_forward.1} parent=5 // pred_check_branch
      %508 = sbr.rel (%p506) target = $region48
    $region47: #{siglip_wrapper_forward.1} parent=5 // pred_region
      %s509 = ssub.s32 %s11, 2
      // Predicated region
      $region49: #{siglip_wrapper_forward.1} parent=47 // pred_check
        %p510 = pneg %p170
      $region50: #{siglip_wrapper_forward.1} parent=47 // pred_check_branch
        %512 = sbr.rel (%p510) target = $region52
      $region51: #{siglip_wrapper_forward.1} parent=47 // pred_region
        %p513 = scmp.lt.s32.totalorder %s17, 1
        %s514 = scalar_select %p513, %s17, 1
        %s515 = smul.addr %s514, 2
        %s516 = scalar_lea.vmem %s5, %s515
      $region52: #{siglip_wrapper_forward.1} parent=47 // pred_fallthru
        _
    $region48: #{siglip_wrapper_forward.1} parent=5 // pred_fallthru
      _
  $region6: #{siglip_wrapper_forward.1} parent=0 // loop_footer
    %s15 = sadd.s32 1, %s11
  $region7: #{siglip_wrapper_forward.1} parent=0 // loop_footer_branch
    %10 = sbr.rel target = $region3
  $region8: #{siglip_wrapper_forward.1} parent=0 // loop_exit
    _

</llo_original>
